<compile_context>
chip_gen: v6e
topology: v6e:2x2x1
jax: 0.10.0
libtpu: 0.0.40
codegen_flags: <defaults>
</compile_context>

<pallas_src>
import functools
import math

import jax
import jax.numpy as jnp
from jax.experimental import pallas as pl
from jax.experimental.pallas import tpu as pltpu

_SHIFT = math.log(2.0)            # torch.log(torch.tensor(2.0)).item()
_LANE = 128
_SINGLE_STEP_BYTES = 256 << 10    # below this, pipelining can't help -> 1 step


@functools.lru_cache(maxsize=1)
def _chip_config():
    """Per-generation tiling parameters."""
    try:
        kind = jax.devices()[0].device_kind.lower()
    except Exception:  # pragma: no cover - defensive
        kind = ""
    if "v7" in kind or "7x" in kind:
        # ~3.2 TB/s HBM but only 64 MiB VMEM/TC and 2 TCs: big tiles, explicit
        # (bounded) VMEM limit, and >=4 grid steps for megacore sharding.
        return {"tile_bytes": 6 << 20, "vmem_limit": 48 << 20,
                "min_steps": 4, "native_bf16_eup": True}
    if "v6" in kind:
        return {"tile_bytes": 4 << 20, "vmem_limit": 64 << 20,
                "min_steps": 2, "native_bf16_eup": False}
    if "v5" in kind:
        return {"tile_bytes": 2 << 20, "vmem_limit": 64 << 20,
                "min_steps": 2, "native_bf16_eup": False}
    # Unknown / older chips: conservative defaults.
    return {"tile_bytes": 1 << 20, "vmem_limit": None,
            "min_steps": 2, "native_bf16_eup": False}


def _compute_dtype(dtype, cfg):
    d = jnp.dtype(dtype)
    if cfg["native_bf16_eup"] and d == jnp.dtype(jnp.bfloat16):
        return jnp.bfloat16  # keep exp/log1p on the bf16 EUP (v7x)
    return jnp.float32


def _shifted_softplus_kernel(x_ref, o_ref, *, compute_dtype):
    # Numerically stable softplus: max(x, 0) + log1p(exp(-|x|)).
    x = x_ref[...].astype(compute_dtype)
    sp = jnp.maximum(x, 0) + jnp.log1p(jnp.exp(-jnp.abs(x)))
    o_ref[...] = (sp - _SHIFT).astype(o_ref.dtype)


def _launch(x2d, block_rows, grid_steps, compute_dtype, vmem_limit):
    rows, cols = x2d.shape
    kernel = functools.partial(_shifted_softplus_kernel,
                               compute_dtype=compute_dtype)
    cp_kwargs = {"dimension_semantics": ("parallel",)}
    if vmem_limit is not None:
        cp_kwargs["vmem_limit_bytes"] = int(vmem_limit)
    return pl.pallas_call(
        kernel,
        out_shape=jax.ShapeDtypeStruct((rows, cols), x2d.dtype),
        grid=(grid_steps,),
        in_specs=[pl.BlockSpec((block_rows, cols), lambda i: (i, 0))],
        out_specs=pl.BlockSpec((block_rows, cols), lambda i: (i, 0)),
        compiler_params=pltpu.CompilerParams(**cp_kwargs),
    )(x2d)


def _run_aligned(x_flat, cfg):
    """Kernel over a flat array whose length is a positive multiple of 128."""
    n = x_flat.shape[0]
    dtype = x_flat.dtype
    itemsize = jnp.dtype(dtype).itemsize
    compute_dtype = _compute_dtype(dtype, cfg)

    # Lane-dense column count (multiple of 128). Blocks span the full width, so
    # the exact value barely matters; moderate cols keeps row tiling flexible.
    cols = _LANE
    for c in (1024, 512, 256):
        if n % c == 0:
            cols = c
            break
    rows = n // cols
    slab_bytes = n * itemsize

    if slab_bytes <= _SINGLE_STEP_BYTES:
        # Tiny slab: one grid step, block == full slab (no (8,128) constraint).
        out2d = _launch(x_flat.reshape(rows, cols), rows, 1,
                        compute_dtype, cfg["vmem_limit"])
        return out2d.reshape(-1)

    # Sublane multiple for this dtype: 8 for f32, 16 for bf16/f16, 32 for int8.
    sub = max(8, 32 // max(1, itemsize))
    # Target tile size for this generation...
    tile_rows = max(sub, (cfg["tile_bytes"] // (cols * itemsize)) // sub * sub)
    # ...but always emit >= min_steps grid steps so DMA/compute pipeline and
    # (on v7x) both TensorCores get work from the "parallel" axis.
    cap_rows = max(sub, (pl.cdiv(rows, cfg["min_steps"]) // sub) * sub)
    block_rows = min(tile_rows, cap_rows, rows)
    grid_steps = pl.cdiv(rows, block_rows)

    out2d = _launch(x_flat.reshape(rows, cols), block_rows, grid_steps,
                    compute_dtype, cfg["vmem_limit"])
    return out2d.reshape(-1)


def shifted_softplus(x: jax.Array) -> jax.Array:
    """Applies softplus(x) - log(2) elementwise via a Pallas TPU kernel."""
    orig_shape = x.shape
    dtype = x.dtype
    n = x.size
    if n == 0:
        return x

    cfg = _chip_config()
    x_flat = x.reshape(-1)
    n_aligned = (n // _LANE) * _LANE

    if n_aligned == n:
        # Common case: no padding, no slicing — exactly 1 read + 1 write.
        return _run_aligned(x_flat, cfg).reshape(orig_shape)

    if n_aligned == 0:
        # Fewer than 128 elements: single full-block kernel step.
        out = _launch(x_flat.reshape(1, n), 1, 1,
                      _compute_dtype(dtype, cfg), cfg["vmem_limit"])
        return out.reshape(orig_shape)

    # Ragged: kernel over the 128-aligned prefix; finish the <128-element tail
    # with plain jnp (no full-array pad / post-slice round trips).
    head = _run_aligned(x_flat[:n_aligned], cfg)
    t = x_flat[n_aligned:].astype(jnp.float32)
    tail = (jnp.maximum(t, 0.0) + jnp.log1p(jnp.exp(-jnp.abs(t)))
            - _SHIFT).astype(dtype)
    return jnp.concatenate([head, tail]).reshape(orig_shape)


if __name__ == "__main__":
    key = jax.random.PRNGKey(0)
    k0, k1, k2, k3 = jax.random.split(key, 4)

    # Primary test: NCHW input, batch=2, channels=4, spatial=16x16.
    x = jax.random.normal(k0, (2, 4, 16, 16), dtype=jnp.float32) * 3.0
    y = shifted_softplus(x)
    jax.block_until_ready(y)
    y_ref = jax.nn.softplus(x) - _SHIFT
    assert y.shape == x.shape and y.dtype == x.dtype
    assert jnp.allclose(y, y_ref, atol=1e-5, rtol=1e-5)

    # Multi-grid-step pipelined path (4 MiB f32 slab -> >=2 steps, >=4 on v7x).
    x_big = jax.random.normal(k1, (8, 32, 64, 64), dtype=jnp.float32) * 3.0
    y_big = shifted_softplus(x_big)
    jax.block_until_ready(y_big)
    assert jnp.allclose(y_big, jax.nn.softplus(x_big) - _SHIFT,
                        atol=1e-5, rtol=1e-5)

    # Ragged size (not a multiple of 128): aligned-prefix kernel + jnp tail.
    x_odd = jax.random.normal(k2, (3, 5, 7, 11), dtype=jnp.float32) * 3.0
    y_odd = shifted_softplus(x_odd)
    jax.block_until_ready(y_odd)
    assert y_odd.shape == x_odd.shape
    assert jnp.allclose(y_odd, jax.nn.softplus(x_odd) - _SHIFT,
                        atol=1e-5, rtol=1e-5)

    # bf16 input (native-dtype transcendentals on v7x, f32 upcast elsewhere).
    x_bf = (jax.random.normal(k3, (2, 4, 16, 16), dtype=jnp.float32)
            * 3.0).astype(jnp.bfloat16)
    y_bf = shifted_softplus(x_bf)
    jax.block_until_ready(y_bf)
    y_bf_ref = jax.nn.softplus(x_bf.astype(jnp.float32)) - _SHIFT
    assert y_bf.dtype == jnp.bfloat16
    assert jnp.allclose(y_bf.astype(jnp.float32), y_bf_ref,
                        atol=5e-2, rtol=5e-2)

    print("KERNEL_OK")
</pallas_src>

<mosaic_0001>
module attributes {stable_mosaic.version = 11 : i64} {
  func.func @_shifted_softplus_kernel(%arg0: i32, %arg1: memref<2x1024xf32, #tpu.memory_space<vmem>>, %arg2: memref<2x1024xf32, #tpu.memory_space<vmem>>) attributes {dimension_semantics = [#tpu.dimension_semantics<parallel>], iteration_bounds = array<i64: 1>, scalar_prefetch = 0 : i64, scratch_operands = 0 : i64, tpu.core_type = #tpu.core_type<tc>, window_params = [{transform_indices = @transform_0, window_bounds = array<i64: 2, 1024>}, {transform_indices = @transform_1, window_bounds = array<i64: 2, 1024>}]} {
    %c0 = arith.constant 0 : index
    %c0_0 = arith.constant 0 : index
    %0 = vector.load %arg1[%c0, %c0_0] : memref<2x1024xf32, #tpu.memory_space<vmem>>, vector<2x1024xf32>
    %cst = arith.constant 0.000000e+00 : f32
    %1 = vector.broadcast %cst : f32 to vector<2x1024xf32>
    %2 = arith.maximumf %0, %1 : vector<2x1024xf32>
    %3 = math.absf %0 : vector<2x1024xf32>
    %cst_1 = arith.constant 0.000000e+00 : f32
    %4 = vector.broadcast %cst_1 : f32 to vector<2x1024xf32>
    %5 = arith.subf %4, %3 : vector<2x1024xf32>
    %6 = math.exp %5 : vector<2x1024xf32>
    %7 = math.log1p %6 : vector<2x1024xf32>
    %8 = arith.addf %2, %7 : vector<2x1024xf32>
    %cst_2 = arith.constant 0.693147182 : f32
    %9 = vector.broadcast %cst_2 : f32 to vector<2x1024xf32>
    %10 = arith.subf %8, %9 : vector<2x1024xf32>
    %c0_3 = arith.constant 0 : index
    %c0_4 = arith.constant 0 : index
    %11 = vector.load %arg2[%c0_3, %c0_4] : memref<2x1024xf32, #tpu.memory_space<vmem>>, vector<2x1024xf32>
    tpu.vector_store %arg2[%c0_3, %c0_4], %10 {strides = array<i32>} : memref<2x1024xf32, #tpu.memory_space<vmem>>, vector<2x1024xf32>,
    return
  }
  func.func @transform_0(%arg0: i32) -> (i32, i32) {
    %c0_i32 = arith.constant 0 : i32
    %c0_i32_0 = arith.constant 0 : i32
    return %arg0, %c0_i32 : i32, i32
  }
  func.func @transform_1(%arg0: i32) -> (i32, i32) {
    %c0_i32 = arith.constant 0 : i32
    %c0_i32_0 = arith.constant 0 : i32
    return %arg0, %c0_i32 : i32, i32
  }
}

</mosaic_0001>

<llo_original>
// kernel: tpu_custom_call.1
$region0: #{tpu_custom_call.1}
  #allocation0 [shape = 'u32[]', space=smem, size = 0x4, offset = 0x4, fixed_abs, tag = 'smem constant byte address 0x4 - core index']
  #allocation1 [shape = 'u32[144,128]{1,0:T(1,128)}', space=vmem, size = 0x12000, scoped, tag = 'internal scratch']
  %s0 = inlined_call_operand.hbm [shape: f32[2,1024], index: 0, kind: input, shape index: {}]
  %s1 = inlined_call_operand.hbm [shape: f32[2,1024], index: 1, kind: output, shape index: {}]
  %s2 = sld [smem:[#allocation0]]
  $region18: #{tpu_custom_call.1} parent=0
    _
  %s4 = ssub.s32 1, %s2
  %s5 = scalar_select 0, %s4, %s2
  $region1: #{tpu_custom_call.1} parent=0
    #allocation2 [shape = 'u8[8192]{0}', space=vmem, size = 0x2000, scoped, tag = 'input window, operand 0, single buffered']
    #allocation3 [shape = 's32[1]{0}', space=sflag, size = 0x4, scoped, tag = 'scoped memory for tpu_custom_call.1']
    #allocation4 [shape = 's32[1]{0}', space=sflag, size = 0x4, scoped, tag = 'scoped memory for tpu_custom_call.1']
    #allocation5 [shape = 'u8[8192]{0}', space=vmem, size = 0x2000, scoped, tag = 'output window, operand 0, single buffered']
    %6 = vsyncpa [#allocation3], 0
    %7 = vsyncpa [#allocation4], 0
    // Predicated region
    $region2: #{tpu_custom_call.1} parent=1 // pred_check
      _
    $region3: #{tpu_custom_call.1} parent=1 // pred_check_branch
      %9 = sbr.rel (0) target = $region5
    $region4: #{tpu_custom_call.1} parent=1 // pred_region
      %s11 = ssub.s32 256, 256
      %12 = vsyncadd [#allocation3], %s11
      %s14 = sshll.u32 [#allocation2], 4
      %s15 = int_to_ptr.vmem [resolvable:$true] %s14
      %17 = dma.hbm_to_vmem [thread:$0]  %s0, 256, %s15, [#allocation3]
    $region5: #{tpu_custom_call.1} parent=1 // pred_fallthru
      _
    // Predicated region
    $region6: #{tpu_custom_call.1} parent=1 // pred_check
      _
    $region7: #{tpu_custom_call.1} parent=1 // pred_check_branch
      %19 = sbr.rel (0) target = $region9
    $region8: #{tpu_custom_call.1} parent=1 // pred_region
      %20 = dma.done [#allocation3], 256
    $region9: #{tpu_custom_call.1} parent=1 // pred_fallthru
      _
    %v21 = vld [vmem:[#allocation2] sm:$0xff]
    %v22 = vld [vmem:[#allocation2 + $0x8] sm:$0xff]
    %v23 = vmax.f32 %v21, 0.0
    %v24 = vmax.f32 %v22, 0.0
    %v25 = vand.u32 2147483647, %v21
    %v26 = vand.u32 2147483647, %v22
    %v27 = vsub.f32 0.0, %v25
    %v28 = vsub.f32 0.0, %v26
    %v29 = vmul.f32 %v27, 1.442695
    %v30 = vpow.pop %v29
    %v31 = vmul.f32 %v28, 1.442695
    %v32 = vpow.pop %v31
    %v33 = vadd.f32 %v30, 1.0
    %v34 = vlog2.pop %v33
    %v35 = vmul.f32 %v34, 0.6931472
    %v36 = vmul.f32 -0.5, %v30
    %v37 = vadd.f32 %v36, 1.0
    %v38 = vmul.f32 %v37, %v30
    %v39 = vand.u32 2147483647, %v30
    %vm40 = vcmp.lt.f32.partialorder %v39, 0.0004427343
    %v41 = vsel %vm40, %v38, %v35
    %v42 = vadd.f32 %v32, 1.0
    %v43 = vlog2.pop %v42
    %v44 = vmul.f32 %v43, 0.6931472
    %v45 = vmul.f32 -0.5, %v32
    %v46 = vadd.f32 %v45, 1.0
    %v47 = vmul.f32 %v46, %v32
    %v48 = vand.u32 2147483647, %v32
    %vm49 = vcmp.lt.f32.partialorder %v48, 0.0004427343
    %v50 = vsel %vm49, %v47, %v44
    %v51 = vadd.f32 %v23, %v41
    %v52 = vadd.f32 %v24, %v50
    %v53 = vsub.f32 %v51, 0.6931472
    %v54 = vsub.f32 %v52, 0.6931472
    %55 = vst [vmem:[#allocation5] sm:$0xff] %v53
    %56 = vst [vmem:[#allocation5 + $0x8] sm:$0xff] %v54
    // Predicated region
    $region10: #{tpu_custom_call.1} parent=1 // pred_check
      _
    $region11: #{tpu_custom_call.1} parent=1 // pred_check_branch
      %58 = sbr.rel (0) target = $region13
    $region12: #{tpu_custom_call.1} parent=1 // pred_region
      %s60 = ssub.s32 256, 256
      %61 = vsyncadd [#allocation4], %s60
      %s63 = sshll.u32 [#allocation5], 4
      %s64 = int_to_ptr.vmem [resolvable:$true] %s63
      %66 = dma.vmem_to_hbm [thread:$0]  %s64, 256, %s1, [#allocation4]
    $region13: #{tpu_custom_call.1} parent=1 // pred_fallthru
      _
    // Predicated region
    $region14: #{tpu_custom_call.1} parent=1 // pred_check
      _
    $region15: #{tpu_custom_call.1} parent=1 // pred_check_branch
      %68 = sbr.rel (0) target = $region17
    $region16: #{tpu_custom_call.1} parent=1 // pred_region
      %69 = dma.done [#allocation4], 256
    $region17: #{tpu_custom_call.1} parent=1 // pred_fallthru
      _
    %70 = vsyncpa [#allocation3], 1
    %71 = vsyncpa [#allocation4], 1

</llo_original>
